<compile_context>
chip_gen: v6e
topology: v6e:2x2x1
jax: 0.10.0
libtpu: 0.0.40
codegen_flags: <defaults>
</compile_context>

<pallas_src>
import jax
import jax.numpy as jnp
from jax import lax
from jax.experimental import pallas as pl
from jax.experimental.pallas import tpu as pltpu


def _round_up(x, m):
    return ((x + m - 1) // m) * m


def _gpt_head_kernel(x_ref, w_ref, out_ref):
    # x_ref:   (bt_tile, E)      bf16 — streamed along the inner (BT) grid axis
    # w_ref:   (v_tile, E)       bf16 — re-used across the whole inner axis
    #                                   (fetched once per outer vocab step)
    # out_ref: (bt_tile, v_tile) f32 (or bf16) — lane-dense store, boundary
    #                                            blocks masked by Pallas
    out_ref[...] = lax.dot_general(
        x_ref[...],
        w_ref[...],
        dimension_numbers=(((1,), (1,)), ((), ())),   # contract on E (x @ W.T)
        preferred_element_type=jnp.float32,           # f32 MXU accumulation
    ).astype(out_ref.dtype)


def dummy_gpt_forward(in_idx, tok_emb, pos_emb, w_out, *,
                      v_tile=2048, bt_tile=512, logits_dtype=jnp.float32):
    """Forward pass of DummyGPTModel.

    in_idx:  (B, T) int32 token ids
    tok_emb: (V, E) token embedding table
    pos_emb: (C, E) positional embedding table (C = context_length)
    w_out:   (V, E) output-head weight (nn.Linear(E, V, bias=False));
             pass it pre-cast to bf16 to avoid a per-call cast of the big weight.
    returns: (B, T, V) logits in `logits_dtype` (f32 default; bf16 optional on
             bandwidth-starved parts — accumulation is f32 either way).
    """
    B, T = in_idx.shape
    V, E = w_out.shape
    C = pos_emb.shape[0]
    if T > C:
        raise ValueError(f"sequence length {T} exceeds context_length {C}")

    # ---- embedding lookup + positional add (fused by jit around the kernel) --
    # TODO(synk): the token gather stays in XLA (jnp.take); fusing it into the
    # kernel would need per-row manual DMA since the table won't fit VMEM.
    tok = jnp.take(tok_emb, in_idx.reshape(-1), axis=0).reshape(B, T, E)
    x = (tok + pos_emb[:T][None, :, :]).reshape(B * T, E)
    # TODO(synk): training-mode dropout (drop_emb) is stochastic; eval identity used.
    # DummyTransformerBlock / DummyLayerNorm are identities -> nothing to do.

    x_bf16 = x.astype(jnp.bfloat16)
    w_bf16 = w_out if w_out.dtype == jnp.bfloat16 else w_out.astype(jnp.bfloat16)

    BT = B * T

    # ---- tile clamping (no array padding; boundary blocks are masked) -------
    if BT <= bt_tile:
        bt_tile = BT                               # full-extent block (any size ok)
    else:
        bt_tile = _round_up(min(bt_tile, BT), 16)  # bf16 sublane packing
    if V <= v_tile:
        v_tile = V                                 # full-extent block
    else:
        v_tile = _round_up(min(v_tile, V), 128)    # lane-dense, unmasked stores

    # vocab axis OUTER (slow) so W is fetched once per vocab tile; BT inner.
    grid = (pl.cdiv(V, v_tile), pl.cdiv(BT, bt_tile))

    out_itemsize = jnp.dtype(logits_dtype).itemsize
    tile_bytes = 2 * (bt_tile * E * 2 + v_tile * E * 2
                      + bt_tile * v_tile * out_itemsize)        # double-buffered
    vmem_limit = int(min(max(int(tile_bytes * 1.25), 32 * 1024 * 1024),
                         48 * 1024 * 1024))                     # v7x-safe cap

    cost = pl.CostEstimate(
        flops=2 * BT * V * E,
        transcendentals=0,
        bytes_accessed=BT * E * 2 + V * E * 2 + BT * V * out_itemsize,
    )

    logits_flat = pl.pallas_call(
        _gpt_head_kernel,
        out_shape=jax.ShapeDtypeStruct((BT, V), logits_dtype),
        grid_spec=pltpu.PrefetchScalarGridSpec(
            num_scalar_prefetch=0,
            grid=grid,
            in_specs=[
                pl.BlockSpec((bt_tile, E), lambda j, i: (i, 0)),   # activations
                pl.BlockSpec((v_tile, E), lambda j, i: (j, 0)),    # W_out rows
            ],
            out_specs=pl.BlockSpec((bt_tile, v_tile), lambda j, i: (i, j)),
        ),
        compiler_params=pltpu.CompilerParams(
            dimension_semantics=("parallel", "parallel"),
            vmem_limit_bytes=vmem_limit,
        ),
        cost_estimate=cost,
    )(x_bf16, w_bf16)

    return logits_flat.reshape(B, T, V)


if __name__ == "__main__":
    # Small config consistent with the module's __init__.
    cfg = dict(
        vocab_size=256,
        context_length=16,
        emb_dim=32,
        drop_rate=0.1,
        n_layers=2,   # DummyTransformerBlock is identity; n_layers has no effect
    )
    B, T = 2, 8

    key = jax.random.PRNGKey(0)
    k_tok, k_pos, k_out, k_idx = jax.random.split(key, 4)

    tok_emb = jax.random.normal(k_tok, (cfg["vocab_size"], cfg["emb_dim"]), jnp.float32)
    pos_emb = jax.random.normal(k_pos, (cfg["context_length"], cfg["emb_dim"]), jnp.float32)
    w_out = jax.random.normal(k_out, (cfg["vocab_size"], cfg["emb_dim"]), jnp.float32) * 0.02

    in_idx = jax.random.randint(k_idx, (B, T), 0, cfg["vocab_size"], jnp.int32)

    # Pre-cast W once (weight-load time) and jit the wrapper so the token
    # gather + pos add + bf16 cast fuse into a single XLA pass before the kernel.
    w_bf16 = w_out.astype(jnp.bfloat16)
    fwd = jax.jit(dummy_gpt_forward)

    logits = jax.block_until_ready(fwd(in_idx, tok_emb, pos_emb, w_bf16))

    # Pure-JAX f32 reference; tolerance accounts for bf16 operands (f32 accum).
    x_ref = jnp.take(tok_emb, in_idx, axis=0) + pos_emb[:T][None, :, :]
    ref = jnp.einsum("bte,ve->btv", x_ref, w_out)
    assert logits.shape == (B, T, cfg["vocab_size"])
    assert jnp.allclose(logits, ref, atol=2e-2, rtol=2e-2), float(jnp.abs(logits - ref).max())

    print("KERNEL_OK")
</pallas_src>

<mosaic_0001>
module attributes {stable_mosaic.version = 11 : i64} {
  func.func @_gpt_head_kernel(%arg0: i32, %arg1: i32, %arg2: memref<16x32xbf16, #tpu.memory_space<vmem>>, %arg3: memref<256x32xbf16, #tpu.memory_space<vmem>>, %arg4: memref<16x256xf32, #tpu.memory_space<vmem>>) attributes {dimension_semantics = [#tpu.dimension_semantics<parallel>, #tpu.dimension_semantics<parallel>], iteration_bounds = array<i64: 1, 1>, scalar_prefetch = 0 : i64, scratch_operands = 0 : i64, tpu.core_type = #tpu.core_type<tc>, window_params = [{transform_indices = @transform_0, window_bounds = array<i64: 16, 32>}, {transform_indices = @transform_1, window_bounds = array<i64: 256, 32>}, {transform_indices = @transform_2, window_bounds = array<i64: 16, 256>}]} {
    %c0 = arith.constant 0 : index
    %c0_0 = arith.constant 0 : index
    %0 = vector.load %arg2[%c0, %c0_0] : memref<16x32xbf16, #tpu.memory_space<vmem>>, vector<16x32xbf16>
    %c0_1 = arith.constant 0 : index
    %c0_2 = arith.constant 0 : index
    %1 = vector.load %arg3[%c0_1, %c0_2] : memref<256x32xbf16, #tpu.memory_space<vmem>>, vector<256x32xbf16>
    %cst = arith.constant dense<0.000000e+00> : vector<16x256xf32>
    %2 = tpu.matmul %0, %1, %cst {dimension_numbers = #tpu.dot_dimension_numbers<[1], [1], [0], [0], [0, 0, 1, 0], [], []>} : vector<16x32xbf16>, vector<256x32xbf16>, vector<16x256xf32> -> vector<16x256xf32>
    %c0_3 = arith.constant 0 : index
    %c0_4 = arith.constant 0 : index
    %3 = vector.load %arg4[%c0_3, %c0_4] : memref<16x256xf32, #tpu.memory_space<vmem>>, vector<16x256xf32>
    tpu.vector_store %arg4[%c0_3, %c0_4], %2 {strides = array<i32>} : memref<16x256xf32, #tpu.memory_space<vmem>>, vector<16x256xf32>,
    return
  }
  func.func @transform_0(%arg0: i32, %arg1: i32) -> (i32, i32) {
    %c0_i32 = arith.constant 0 : i32
    %c0_i32_0 = arith.constant 0 : i32
    return %arg1, %c0_i32 : i32, i32
  }
  func.func @transform_1(%arg0: i32, %arg1: i32) -> (i32, i32) {
    %c0_i32 = arith.constant 0 : i32
    %c0_i32_0 = arith.constant 0 : i32
    return %arg0, %c0_i32 : i32, i32
  }
  func.func @transform_2(%arg0: i32, %arg1: i32) -> (i32, i32) {
    %c0_i32 = arith.constant 0 : i32
    return %arg1, %arg0 : i32, i32
  }
}

</mosaic_0001>

<llo_original>
// kernel: dummy_gpt_forward.1
$region0: #{dummy_gpt_forward.1}
  #allocation0 [shape = 'u32[]', space=smem, size = 0x4, offset = 0x4, fixed_abs, tag = 'smem constant byte address 0x4 - core index']
  #allocation1 [shape = 'u32[144,128]{1,0:T(1,128)}', space=vmem, size = 0x12000, scoped, tag = 'internal scratch']
  %s0 = inlined_call_operand.vmem [shape: bf16[16,32], index: 0, kind: input, shape index: {}]
  %s1 = inlined_call_operand.vmem [shape: bf16[256,32], index: 1, kind: input, shape index: {}]
  %s2 = inlined_call_operand.hbm [shape: f32[16,256], index: 2, kind: output, shape index: {}]
  %s3 = sld [smem:[#allocation0]]
  $region18: #{dummy_gpt_forward.1} parent=0
    _
  %s5 = ssub.s32 1, %s3
  %s6 = scalar_select 0, %s5, %s3
  $region1: #{dummy_gpt_forward.1} parent=0
    #allocation2 [shape = 'u8[16384]{0}', space=vmem, size = 0x4000, scoped, tag = 'output window, operand 0, single buffered']
    #allocation3 [shape = 's32[1]{0}', space=sflag, size = 0x4, scoped, tag = 'scoped memory for dummy_gpt_forward.1']
    %7 = vsyncpa [#allocation3], 0
    // Predicated region
    $region2: #{dummy_gpt_forward.1} parent=1 // pred_check
      _
    $region3: #{dummy_gpt_forward.1} parent=1 // pred_check_branch
      %9 = sbr.rel (0) target = $region5
    $region4: #{dummy_gpt_forward.1} parent=1 // pred_region
      _
    $region5: #{dummy_gpt_forward.1} parent=1 // pred_fallthru
      _
    // Predicated region
    $region6: #{dummy_gpt_forward.1} parent=1 // pred_check
      _
    $region7: #{dummy_gpt_forward.1} parent=1 // pred_check_branch
      %11 = sbr.rel (0) target = $region9
    $region8: #{dummy_gpt_forward.1} parent=1 // pred_region
      _
    $region9: #{dummy_gpt_forward.1} parent=1 // pred_fallthru
      _
    %v13 = vld [vmem:[%s0] sm:$0xf]
    %v14 = vld [vmem:[%s0 + $0x4] sm:$0xf]
    %v15 = vld [vmem:[%s1] sm:$0xf]
    %v16 = vld [vmem:[%s1 + $0x4] sm:$0xf]
    %v17 = vld [vmem:[%s1 + $0x8] sm:$0xf]
    %v18 = vld [vmem:[%s1 + $0xc] sm:$0xf]
    %v19 = vld [vmem:[%s1 + $0x10] sm:$0xf]
    %v20 = vld [vmem:[%s1 + $0x14] sm:$0xf]
    %v21 = vld [vmem:[%s1 + $0x18] sm:$0xf]
    %v22 = vld [vmem:[%s1 + $0x1c] sm:$0xf]
    %v23 = vld [vmem:[%s1 + $0x20] sm:$0xf]
    %v24 = vld [vmem:[%s1 + $0x24] sm:$0xf]
    %v25 = vld [vmem:[%s1 + $0x28] sm:$0xf]
    %v26 = vld [vmem:[%s1 + $0x2c] sm:$0xf]
    %v27 = vld [vmem:[%s1 + $0x30] sm:$0xf]
    %v28 = vld [vmem:[%s1 + $0x34] sm:$0xf]
    %v29 = vld [vmem:[%s1 + $0x38] sm:$0xf]
    %v30 = vld [vmem:[%s1 + $0x3c] sm:$0xf]
    %v31 = vld [vmem:[%s1 + $0x40] sm:$0xf]
    %v32 = vld [vmem:[%s1 + $0x44] sm:$0xf]
    %v33 = vld [vmem:[%s1 + $0x48] sm:$0xf]
    %v34 = vld [vmem:[%s1 + $0x4c] sm:$0xf]
    %v35 = vld [vmem:[%s1 + $0x50] sm:$0xf]
    %v36 = vld [vmem:[%s1 + $0x54] sm:$0xf]
    %v37 = vld [vmem:[%s1 + $0x58] sm:$0xf]
    %v38 = vld [vmem:[%s1 + $0x5c] sm:$0xf]
    %v39 = vld [vmem:[%s1 + $0x60] sm:$0xf]
    %v40 = vld [vmem:[%s1 + $0x64] sm:$0xf]
    %v41 = vld [vmem:[%s1 + $0x68] sm:$0xf]
    %v42 = vld [vmem:[%s1 + $0x6c] sm:$0xf]
    %v43 = vld [vmem:[%s1 + $0x70] sm:$0xf]
    %v44 = vld [vmem:[%s1 + $0x74] sm:$0xf]
    %v45 = vld [vmem:[%s1 + $0x78] sm:$0xf]
    %v46 = vld [vmem:[%s1 + $0x7c] sm:$0xf]
    %v49 = vunpack.c.l.b16 %v13
    %v50 = vunpack.c.l.b16 %v14
    %v51 = vpack.c.b16 %v50, %v49
    %v84 = vunpack.c.l.b16 %v15
    %v85 = vunpack.c.l.b16 %v16
    %v86 = vunpack.c.l.b16 %v17
    %v87 = vunpack.c.l.b16 %v18
    %v88 = vunpack.c.l.b16 %v19
    %v89 = vunpack.c.l.b16 %v20
    %v90 = vunpack.c.l.b16 %v21
    %v91 = vunpack.c.l.b16 %v22
    %v92 = vunpack.c.l.b16 %v23
    %v93 = vunpack.c.l.b16 %v24
    %v94 = vunpack.c.l.b16 %v25
    %v95 = vunpack.c.l.b16 %v26
    %v96 = vunpack.c.l.b16 %v27
    %v97 = vunpack.c.l.b16 %v28
    %v98 = vunpack.c.l.b16 %v29
    %v99 = vunpack.c.l.b16 %v30
    %v100 = vunpack.c.l.b16 %v31
    %v101 = vunpack.c.l.b16 %v32
    %v102 = vunpack.c.l.b16 %v33
    %v103 = vunpack.c.l.b16 %v34
    %v104 = vunpack.c.l.b16 %v35
    %v105 = vunpack.c.l.b16 %v36
    %v106 = vunpack.c.l.b16 %v37
    %v107 = vunpack.c.l.b16 %v38
    %v108 = vunpack.c.l.b16 %v39
    %v109 = vunpack.c.l.b16 %v40
    %v110 = vunpack.c.l.b16 %v41
    %v111 = vunpack.c.l.b16 %v42
    %v112 = vunpack.c.l.b16 %v43
    %v113 = vunpack.c.l.b16 %v44
    %v114 = vunpack.c.l.b16 %v45
    %v115 = vunpack.c.l.b16 %v46
    %v116 = vpack.c.b16 %v85, %v84
    %v117 = vpack.c.b16 %v87, %v86
    %v118 = vpack.c.b16 %v89, %v88
    %v119 = vpack.c.b16 %v91, %v90
    %v120 = vpack.c.b16 %v93, %v92
    %v121 = vpack.c.b16 %v95, %v94
    %v122 = vpack.c.b16 %v97, %v96
    %v123 = vpack.c.b16 %v99, %v98
    %v124 = vpack.c.b16 %v101, %v100
    %v125 = vpack.c.b16 %v103, %v102
    %v126 = vpack.c.b16 %v105, %v104
    %v127 = vpack.c.b16 %v107, %v106
    %v128 = vpack.c.b16 %v109, %v108
    %v129 = vpack.c.b16 %v111, %v110
    %v130 = vpack.c.b16 %v113, %v112
    %v131 = vpack.c.b16 %v115, %v114
    %vm132 = vcmask 261120
    %v134 = vsel %vm132, %v51, 0
    %v137 = vsel %vm132, %v116, 0
    %v140 = vsel %vm132, %v117, 0
    %v143 = vsel %vm132, %v118, 0
    %v146 = vsel %vm132, %v119, 0
    %v149 = vsel %vm132, %v120, 0
    %v152 = vsel %vm132, %v121, 0
    %v155 = vsel %vm132, %v122, 0
    %v158 = vsel %vm132, %v123, 0
    %v161 = vsel %vm132, %v124, 0
    %v164 = vsel %vm132, %v125, 0
    %v167 = vsel %vm132, %v126, 0
    %v170 = vsel %vm132, %v127, 0
    %v173 = vsel %vm132, %v128, 0
    %v176 = vsel %vm132, %v129, 0
    %v179 = vsel %vm132, %v130, 0
    %v182 = vsel %vm132, %v131, 0
    %184 = vmatprep.subr.bf16.mxu0 0
    %185 = vmatpush1.bf16.xpose.msra.mxu0 %v158
    %186 = vmatprep.subr.bf16.mxu0 0
    %187 = vmatpush1.bf16.xpose.msra.mxu0 %v155
    %188 = vmatprep.subr.bf16.mxu0 0
    %189 = vmatpush1.bf16.xpose.msra.mxu0 %v152
    %190 = vmatprep.subr.bf16.mxu0 0
    %191 = vmatpush1.bf16.xpose.msra.mxu0 %v149
    %192 = vmatprep.subr.bf16.mxu0 0
    %193 = vmatpush1.bf16.xpose.msra.mxu0 %v146
    %194 = vmatprep.subr.bf16.mxu0 0
    %195 = vmatpush1.bf16.xpose.msra.mxu0 %v143
    %196 = vmatprep.subr.bf16.mxu0 0
    %197 = vmatpush1.bf16.xpose.msra.mxu0 %v140
    %198 = vmatprep.subr.bf16.mxu0 0
    %199 = vmatpush1.bf16.xpose.msra.mxu0 %v137
    %200 = vmatprep.subr.bf16.mxu0 0
    %201 = vmatpush2.bf16.xpose.msra.mxu0 %v182
    %202 = vmatprep.subr.bf16.mxu0 0
    %203 = vmatpush2.bf16.xpose.msra.mxu0 %v179
    %204 = vmatprep.subr.bf16.mxu0 0
    %205 = vmatpush2.bf16.xpose.msra.mxu0 %v176
    %206 = vmatprep.subr.bf16.mxu0 0
    %207 = vmatpush2.bf16.xpose.msra.mxu0 %v173
    %208 = vmatprep.subr.bf16.mxu0 0
    %209 = vmatpush2.bf16.xpose.msra.mxu0 %v170
    %210 = vmatprep.subr.bf16.mxu0 0
    %211 = vmatpush2.bf16.xpose.msra.mxu0 %v167
    %212 = vmatprep.subr.bf16.mxu0 0
    %213 = vmatpush2.bf16.xpose.msra.mxu0 %v164
    %214 = vmatprep.subr.bf16.mxu0 0
    %215 = vmatpush2.bf16.xpose.msra.mxu0 %v161
    %216 = vmatprep.mubr.bf16.mxu0 0
    %217 = vmatmul.mubr.bf16.gmra.mxu0 %v134
    %v218 = vpop.f32.mrf.mxu0
    %v219 = vadd.f32 0.0, %v218
    %v220 = vpop.f32.mrf.mxu0
    %v221 = vadd.f32 0.0, %v220
    %v222 = vpop.f32.mrf.mxu0
    %v223 = vadd.f32 0.0, %v222
    %v224 = vpop.f32.mrf.mxu0
    %v225 = vadd.f32 0.0, %v224
    %226 = vdwg.mxu0
    %227 = vst [vmem:[#allocation2] sm:$0xff] %v219
    %228 = vst [vmem:[#allocation2 + $0x8] sm:$0xff] %v221
    %229 = vst [vmem:[#allocation2 + $0x10] sm:$0xff] %v223
    %230 = vst [vmem:[#allocation2 + $0x18] sm:$0xff] %v225
    // Predicated region
    $region10: #{dummy_gpt_forward.1} parent=1 // pred_check
      _
    $region11: #{dummy_gpt_forward.1} parent=1 // pred_check_branch
      %232 = sbr.rel (0) target = $region13
    $region12: #{dummy_gpt_forward.1} parent=1 // pred_region
      %s234 = ssub.s32 512, 512
      %235 = vsyncadd [#allocation3], %s234
      %s236 = sshll.u32 [#allocation2], 4
      %s237 = int_to_ptr.vmem [resolvable:$true] %s236
      %242 = dma.vmem_to_hbm [thread:$0]  %s237, 512, %s2, [#allocation3], 256, 256, 16
    $region13: #{dummy_gpt_forward.1} parent=1 // pred_fallthru
      _
    // Predicated region
    $region14: #{dummy_gpt_forward.1} parent=1 // pred_check
      _
    $region15: #{dummy_gpt_forward.1} parent=1 // pred_check_branch
      %244 = sbr.rel (0) target = $region17
    $region16: #{dummy_gpt_forward.1} parent=1 // pred_region
      %245 = dma.done [#allocation3], 512
    $region17: #{dummy_gpt_forward.1} parent=1 // pred_fallthru
      _
    %246 = vsyncpa [#allocation3], 1

</llo_original>
